<compile_context>
chip_gen: v5e
topology: v5e:2x2
jax: 0.10.0
libtpu: 0.0.40
codegen_flags: <defaults>
</compile_context>

<pallas_src>
import jax
import jax.numpy as jnp
from jax.experimental import pallas as pl
from jax.experimental.pallas import tpu as pltpu


# ---------------------------------------------------------------------------
# One-time, trace-free probes (explicit feature / hardware checks instead of
# a broad try/except around the real build).
# ---------------------------------------------------------------------------
def _probe_pipeline_mode():
    if not hasattr(pl, "Buffered"):
        return False
    try:
        pl.BlockSpec((8, 128), lambda i: (0, 0), pipeline_mode=pl.Buffered(1))
        return True
    except Exception:
        return False


_HAS_PIPELINE_MODE = _probe_pipeline_mode()


def _get_tpu_info():
    try:
        return pltpu.get_tpu_info()
    except Exception:
        return None


_TPU_INFO = _get_tpu_info()


def _vmem_capacity_bytes():
    for name in ("vmem_capacity_bytes", "vmem_bytes", "vmem_size_bytes"):
        v = getattr(_TPU_INFO, name, None)
        if v:
            return int(v)
    # Conservative default: smallest per-TensorCore VMEM of the target
    # generations (v7x: 64 MiB).
    return 64 * 1024 * 1024


def _num_tensorcores():
    for name in ("num_tensorcores", "tensorcore_count", "num_cores",
                 "cores_per_chip"):
        v = getattr(_TPU_INFO, name, None)
        if v:
            return int(v)
    return 1


def _default_vmem_limit():
    # ~80% of physical VMEM: ~51 MiB on v7x (64 MiB/TC), ~102 MiB on
    # v5e/v6e (128 MiB). Leaves headroom for compiler-internal scratch.
    return int(_vmem_capacity_bytes() * 0.8)


# ---------------------------------------------------------------------------
# Kernels
# ---------------------------------------------------------------------------
def _mlp3_fused_kernel(x_ref, w1_ref, b1_ref, w2_ref, b2_ref, w3_ref, b3_ref,
                       o_ref):
    """Fast path: whole input_dim VMEM-resident. Grid = (batch tiles,)."""
    h = jnp.dot(x_ref[...], w1_ref[...], preferred_element_type=jnp.float32)
    h = jnp.maximum(h + b1_ref[...], 0.0).astype(w2_ref.dtype)
    h = jnp.dot(h, w2_ref[...], preferred_element_type=jnp.float32)
    h = jnp.maximum(h + b2_ref[...], 0.0).astype(w3_ref.dtype)
    out = jnp.dot(h, w3_ref[...], preferred_element_type=jnp.float32) + b3_ref[...]
    o_ref[...] = out.astype(o_ref.dtype)


def _mlp3_ktiled_kernel(x_ref, w1_ref, b1_ref, w2_ref, b2_ref, w3_ref, b3_ref,
                        o_ref, acc_ref):
    """Layer-1 K-streamed. Grid = (batch tiles, K tiles); K is a reduction."""
    k = pl.program_id(1)

    @pl.when(k == 0)
    def _init():
        acc_ref[...] = jnp.zeros_like(acc_ref)

    # layer 1 partial: acc += x_tile @ w1_tile  (f32 accumulate on the MXU)
    acc_ref[...] += jnp.dot(x_ref[...], w1_ref[...],
                            preferred_element_type=jnp.float32)

    @pl.when(k == pl.num_programs(1) - 1)
    def _finalize():
        h = jnp.maximum(acc_ref[...] + b1_ref[...], 0.0).astype(w2_ref.dtype)
        h = jnp.dot(h, w2_ref[...], preferred_element_type=jnp.float32)
        h = jnp.maximum(h + b2_ref[...], 0.0).astype(w3_ref.dtype)
        out = jnp.dot(h, w3_ref[...], preferred_element_type=jnp.float32) + b3_ref[...]
        o_ref[...] = out.astype(o_ref.dtype)


# ---------------------------------------------------------------------------
# Helpers
# ---------------------------------------------------------------------------
def _round_up(n, m):
    return (n + m - 1) // m * m


def _cdiv(a, b):
    return (a + b - 1) // b


def _pad2d(a, rows, cols):
    r, c = a.shape
    if r == rows and c == cols:
        return a
    return jnp.pad(a, ((0, rows - r), (0, cols - c)))


def _spec(shape, index_map, n_buffers):
    """BlockSpec with an explicit buffer count when the JAX version supports it."""
    if _HAS_PIPELINE_MODE and n_buffers != 2:
        return pl.BlockSpec(shape, index_map, pipeline_mode=pl.Buffered(n_buffers))
    return pl.BlockSpec(shape, index_map)


def _plan_tiles(B, Dp, Hp, itemsize, out_itemsize, vmem_limit, sublane,
                num_cores, tile_b, tile_k):
    """Choose (tb, tk) under a VMEM budget. Returns a dict describing the plan."""
    budget = int(vmem_limit * 0.85)            # headroom for compiler scratch
    B_rows = _round_up(max(B, 1), sublane)

    wbuf = 1 if _HAS_PIPELINE_MODE else 2      # buffers for never-changing blocks
    # always-resident: w2, w3 + three (1, Hp) f32 biases (>= 8 sublanes each)
    const_bytes = wbuf * (2 * Hp * Hp * itemsize + 3 * 8 * Hp * 4)
    # TODO(synk): hidden_dim so large that w2/w3 alone exceed VMEM would need
    # N-tiling of Hp (not implemented; the compiler will report VMEM overflow).

    def pick_tb(row_bytes, avail):
        """Largest feasible batch tile, then shrink to minimize batch padding."""
        avail = max(avail, sublane * max(row_bytes, 1))
        tb_max = (avail // max(row_bytes, 1)) // sublane * sublane
        tb_max = max(sublane, min(tb_max, B_rows))
        n = _cdiv(B_rows, tb_max)
        if num_cores > 1 and B_rows >= num_cores * sublane:
            n = _round_up(max(n, num_cores), num_cores)    # shard across TCs
        tb = _round_up(_cdiv(B_rows, n), sublane)          # minimize padding
        if tile_b is not None:
            tb = max(sublane, min(tb, _round_up(tile_b, sublane)))
        nb = _round_up(B, tb) // tb
        return tb, nb

    user_tk = None if tile_k is None else _round_up(tile_k, 128)

    # ---- fast path: whole w1 VMEM-resident, K grid collapses to 1 ----------
    w1_fast = wbuf * Dp * Hp * itemsize
    row_fast = 2 * Dp * itemsize + 2 * Hp * out_itemsize   # x (2 bufs) + out (2)
    if (user_tk is None or user_tk >= Dp) and \
       const_bytes + w1_fast + sublane * row_fast <= budget:
        tb, nb = pick_tb(row_fast, budget - const_bytes - w1_fast)
        return {"fast": True, "tb": tb, "nb": nb, "tk": Dp, "nk": 1}

    # ---- K-tiled path: stream w1 over input_dim -----------------------------
    sbuf = 3 if _HAS_PIPELINE_MODE else 2      # deep-buffer the x / w1 streams
    tk_cap = min(Dp, user_tk if user_tk is not None else 2048)
    fixed = const_bytes + sublane * (2 * Hp * out_itemsize + Hp * 4)
    per_tk = sbuf * Hp * itemsize + sublane * sbuf * itemsize
    tk = (budget - fixed) // per_tk if budget > fixed else 128
    tk = max(128, min(tk_cap, (tk // 128) * 128))
    row = sbuf * tk * itemsize + 2 * Hp * out_itemsize + Hp * 4
    avail = budget - const_bytes - sbuf * tk * Hp * itemsize
    tb, nb = pick_tb(row, avail)
    nk = _cdiv(Dp, tk)
    return {"fast": False, "tb": tb, "nb": nb, "tk": tk, "nk": nk}


# ---------------------------------------------------------------------------
# Public wrapper
# ---------------------------------------------------------------------------
def gene_encoder(x, params, *, tile_b=None, tile_k=None,
                 compute_dtype=jnp.bfloat16, out_dtype=None,
                 vmem_limit_bytes=None):
    """Fused 3-layer MLP (Linear -> ReLU -> Linear -> ReLU -> Linear).

    x: [B, D_in]; params: dict w1,b1,w2,b2,w3,b3 with weights stored as
    [in_features, out_features] and biases [1, out_features].
    Matmuls run in `compute_dtype` (default bf16) with f32 accumulation and
    f32 bias + ReLU; pass compute_dtype=jnp.float32 for exact f32 semantics.
    """
    B, D = x.shape
    H = params["w1"].shape[1]
    out_dtype = out_dtype or x.dtype
    compute_dtype = jnp.dtype(compute_dtype)
    itemsize = compute_dtype.itemsize
    out_itemsize = jnp.dtype(out_dtype).itemsize
    sublane = 16 if itemsize == 2 else 8
    if vmem_limit_bytes is None:
        vmem_limit_bytes = _default_vmem_limit()

    Hp = _round_up(max(H, 128), 128)           # lane-dense hidden/output dim
    Dp0 = _round_up(max(D, 128), 128)          # lane-dense input dim

    plan = _plan_tiles(B, Dp0, Hp, itemsize, out_itemsize, vmem_limit_bytes,
                       sublane, _num_tensorcores(), tile_b, tile_k)
    fast, tb, nb, tk, nk = (plan["fast"], plan["tb"], plan["nb"],
                            plan["tk"], plan["nk"])
    Dp = tk * nk
    Bp = tb * nb

    # Zero padding keeps the math exact: padded x columns hit zero w1 rows,
    # padded hidden columns stay exactly zero through bias+ReLU (zero-padded
    # biases), and padded batch rows are sliced off at the end.
    def _b2(b):
        return b.reshape(1, -1) if b.ndim == 1 else b

    xp = _pad2d(x, Bp, Dp).astype(compute_dtype)
    w1 = _pad2d(params["w1"], Dp, Hp).astype(compute_dtype)
    w2 = _pad2d(params["w2"], Hp, Hp).astype(compute_dtype)
    w3 = _pad2d(params["w3"], Hp, Hp).astype(compute_dtype)
    b1 = _pad2d(_b2(params["b1"]), 1, Hp).astype(jnp.float32)
    b2 = _pad2d(_b2(params["b2"]), 1, Hp).astype(jnp.float32)
    b3 = _pad2d(_b2(params["b3"]), 1, Hp).astype(jnp.float32)

    # HBM traffic includes the per-batch-tile re-streaming of w1 (K-tiled path).
    w1_passes = 1 if fast else nb
    cost = pl.CostEstimate(
        flops=2 * Bp * (Dp * Hp + 2 * Hp * Hp),
        transcendentals=0,
        bytes_accessed=int(Bp * Dp * itemsize
                           + w1_passes * Dp * Hp * itemsize
                           + 2 * Hp * Hp * itemsize
                           + 3 * Hp * 4
                           + Bp * Hp * out_itemsize),
    )

    if fast:
        grid = (nb,)
        in_specs = [
            pl.BlockSpec((tb, Dp), lambda i: (i, 0)),          # x tile
            _spec((Dp, Hp), lambda i: (0, 0), 1),              # w1 resident
            _spec((1, Hp), lambda i: (0, 0), 1),               # b1
            _spec((Hp, Hp), lambda i: (0, 0), 1),              # w2
            _spec((1, Hp), lambda i: (0, 0), 1),               # b2
            _spec((Hp, Hp), lambda i: (0, 0), 1),              # w3
            _spec((1, Hp), lambda i: (0, 0), 1),               # b3
        ]
        out_specs = pl.BlockSpec((tb, Hp), lambda i: (i, 0))
        scratch = []
        kernel = _mlp3_fused_kernel
        dim_sem = ("parallel",)
    else:
        sbuf = 3 if (_HAS_PIPELINE_MODE and nk >= 2) else 2
        grid = (nb, nk)                        # batch parallel, K reduction last
        in_specs = [
            _spec((tb, tk), lambda i, k: (i, k), sbuf),        # x stream
            _spec((tk, Hp), lambda i, k: (k, 0), sbuf),        # w1 stream
            _spec((1, Hp), lambda i, k: (0, 0), 1),            # b1
            _spec((Hp, Hp), lambda i, k: (0, 0), 1),           # w2
            _spec((1, Hp), lambda i, k: (0, 0), 1),            # b2
            _spec((Hp, Hp), lambda i, k: (0, 0), 1),           # w3
            _spec((1, Hp), lambda i, k: (0, 0), 1),            # b3
        ]
        out_specs = pl.BlockSpec((tb, Hp), lambda i, k: (i, 0))
        scratch = [pltpu.VMEM((tb, Hp), jnp.float32)]
        kernel = _mlp3_ktiled_kernel
        dim_sem = ("parallel", "arbitrary")

    out = pl.pallas_call(
        kernel,
        out_shape=jax.ShapeDtypeStruct((Bp, Hp), out_dtype),
        grid_spec=pltpu.PrefetchScalarGridSpec(
            num_scalar_prefetch=0,
            grid=grid,
            in_specs=in_specs,
            out_specs=out_specs,
            scratch_shapes=scratch),
        compiler_params=pltpu.CompilerParams(
            dimension_semantics=dim_sem,
            vmem_limit_bytes=int(vmem_limit_bytes)),
        cost_estimate=cost,
    )(xp, w1, b1, w2, b2, w3, b3)

    return out[:B, :H]


# ---------------------------------------------------------------------------
# Params init + pure-JAX reference
# ---------------------------------------------------------------------------
def init_params(key, input_dim, hidden_dim, dtype=jnp.float32):
    """Deterministic init mimicking nn.Linear's U(-1/sqrt(fan_in), 1/sqrt(fan_in))."""
    ks = jax.random.split(key, 6)

    def linear(kw, kb, fan_in, fan_out):
        bound = 1.0 / jnp.sqrt(fan_in)
        w = jax.random.uniform(kw, (fan_in, fan_out), dtype, -bound, bound)
        b = jax.random.uniform(kb, (1, fan_out), dtype, -bound, bound)
        return w, b

    w1, b1 = linear(ks[0], ks[1], input_dim, hidden_dim)
    w2, b2 = linear(ks[2], ks[3], hidden_dim, hidden_dim)
    w3, b3 = linear(ks[4], ks[5], hidden_dim, hidden_dim)
    return {"w1": w1, "b1": b1, "w2": w2, "b2": b2, "w3": w3, "b3": b3}


def gene_encoder_ref(x, p):
    """Pure-JAX reference for correctness check."""
    h = jnp.maximum(x @ p["w1"] + p["b1"], 0.0)
    h = jnp.maximum(h @ p["w2"] + p["b2"], 0.0)
    return h @ p["w3"] + p["b3"]


if __name__ == "__main__":
    key = jax.random.PRNGKey(0)
    k_x, k_p = jax.random.split(key)

    batch, input_dim, hidden_dim = 8, 16, 32
    x = jax.random.normal(k_x, (batch, input_dim), dtype=jnp.float32)
    params = init_params(k_p, input_dim, hidden_dim)
    ref = gene_encoder_ref(x, params)

    # Exact f32 path (matches the PyTorch module's f32 semantics): fast path.
    out_f32 = jax.block_until_ready(
        gene_encoder(x, params, compute_dtype=jnp.float32))
    assert out_f32.shape == (batch, hidden_dim)
    assert jnp.allclose(out_f32, ref, atol=1e-5, rtol=1e-5), "f32 mismatch vs reference"

    # Default path: bf16 matmuls, f32 accumulate / bias / ReLU.
    out_bf16 = jax.block_until_ready(gene_encoder(x, params))
    assert out_bf16.shape == (batch, hidden_dim)
    assert jnp.allclose(out_bf16, ref, atol=1e-1, rtol=1e-1), "bf16 mismatch vs reference"

    # Explicitly exercise the K-tiled accumulator path (tile_k < padded D).
    x2 = jax.random.normal(k_x, (12, 300), dtype=jnp.float32)
    params2 = init_params(k_p, 300, 64)
    ref2 = gene_encoder_ref(x2, params2)
    out2 = jax.block_until_ready(
        gene_encoder(x2, params2, compute_dtype=jnp.float32, tile_k=128))
    assert out2.shape == (12, 64)
    assert jnp.allclose(out2, ref2, atol=1e-4, rtol=1e-4), "K-tiled mismatch vs reference"

    print("KERNEL_OK")
</pallas_src>

<mosaic_0001>
module attributes {stable_mosaic.version = 11 : i64} {
  func.func @_mlp3_fused_kernel(%arg0: i32, %arg1: memref<8x128xf32, #tpu.memory_space<vmem>>, %arg2: memref<128x128xf32, #tpu.memory_space<vmem>>, %arg3: memref<1x128xf32, #tpu.memory_space<vmem>>, %arg4: memref<128x128xf32, #tpu.memory_space<vmem>>, %arg5: memref<1x128xf32, #tpu.memory_space<vmem>>, %arg6: memref<128x128xf32, #tpu.memory_space<vmem>>, %arg7: memref<1x128xf32, #tpu.memory_space<vmem>>, %arg8: memref<8x128xf32, #tpu.memory_space<vmem>>) attributes {dimension_semantics = [#tpu.dimension_semantics<parallel>], iteration_bounds = array<i64: 1>, scalar_prefetch = 0 : i64, scratch_operands = 0 : i64, tpu.core_type = #tpu.core_type<tc>, window_params = [{transform_indices = @transform_0, window_bounds = array<i64: 8, 128>}, {pipeline_mode = #tpu.pipeline_mode<synchronous>, transform_indices = @transform_1, window_bounds = array<i64: 128, 128>}, {pipeline_mode = #tpu.pipeline_mode<synchronous>, transform_indices = @transform_2, window_bounds = array<i64: 1, 128>}, {pipeline_mode = #tpu.pipeline_mode<synchronous>, transform_indices = @transform_3, window_bounds = array<i64: 128, 128>}, {pipeline_mode = #tpu.pipeline_mode<synchronous>, transform_indices = @transform_4, window_bounds = array<i64: 1, 128>}, {pipeline_mode = #tpu.pipeline_mode<synchronous>, transform_indices = @transform_5, window_bounds = array<i64: 128, 128>}, {pipeline_mode = #tpu.pipeline_mode<synchronous>, transform_indices = @transform_6, window_bounds = array<i64: 1, 128>}, {transform_indices = @transform_7, window_bounds = array<i64: 8, 128>}]} {
    %c0 = arith.constant 0 : index
    %c0_0 = arith.constant 0 : index
    %0 = vector.load %arg1[%c0, %c0_0] : memref<8x128xf32, #tpu.memory_space<vmem>>, vector<8x128xf32>
    %c0_1 = arith.constant 0 : index
    %c0_2 = arith.constant 0 : index
    %1 = vector.load %arg2[%c0_1, %c0_2] : memref<128x128xf32, #tpu.memory_space<vmem>>, vector<128x128xf32>
    %cst = arith.constant dense<0.000000e+00> : vector<8x128xf32>
    %2 = tpu.matmul %0, %1, %cst {dimension_numbers = #tpu.dot_dimension_numbers<[1], [0], [0], [1], [0, 0, 1, 1], [], []>} : vector<8x128xf32>, vector<128x128xf32>, vector<8x128xf32> -> vector<8x128xf32>
    %c0_3 = arith.constant 0 : index
    %c0_4 = arith.constant 0 : index
    %3 = vector.load %arg3[%c0_3, %c0_4] : memref<1x128xf32, #tpu.memory_space<vmem>>, vector<1x128xf32>
    %4 = vector.broadcast %3 : vector<1x128xf32> to vector<8x128xf32>
    %5 = arith.addf %2, %4 : vector<8x128xf32>
    %cst_5 = arith.constant 0.000000e+00 : f32
    %6 = vector.broadcast %cst_5 : f32 to vector<8x128xf32>
    %7 = arith.maximumf %5, %6 : vector<8x128xf32>
    %c0_6 = arith.constant 0 : index
    %c0_7 = arith.constant 0 : index
    %8 = vector.load %arg4[%c0_6, %c0_7] : memref<128x128xf32, #tpu.memory_space<vmem>>, vector<128x128xf32>
    %cst_8 = arith.constant dense<0.000000e+00> : vector<8x128xf32>
    %9 = tpu.matmul %7, %8, %cst_8 {dimension_numbers = #tpu.dot_dimension_numbers<[1], [0], [0], [1], [0, 0, 1, 1], [], []>} : vector<8x128xf32>, vector<128x128xf32>, vector<8x128xf32> -> vector<8x128xf32>
    %c0_9 = arith.constant 0 : index
    %c0_10 = arith.constant 0 : index
    %10 = vector.load %arg5[%c0_9, %c0_10] : memref<1x128xf32, #tpu.memory_space<vmem>>, vector<1x128xf32>
    %11 = vector.broadcast %10 : vector<1x128xf32> to vector<8x128xf32>
    %12 = arith.addf %9, %11 : vector<8x128xf32>
    %cst_11 = arith.constant 0.000000e+00 : f32
    %13 = vector.broadcast %cst_11 : f32 to vector<8x128xf32>
    %14 = arith.maximumf %12, %13 : vector<8x128xf32>
    %c0_12 = arith.constant 0 : index
    %c0_13 = arith.constant 0 : index
    %15 = vector.load %arg6[%c0_12, %c0_13] : memref<128x128xf32, #tpu.memory_space<vmem>>, vector<128x128xf32>
    %cst_14 = arith.constant dense<0.000000e+00> : vector<8x128xf32>
    %16 = tpu.matmul %14, %15, %cst_14 {dimension_numbers = #tpu.dot_dimension_numbers<[1], [0], [0], [1], [0, 0, 1, 1], [], []>} : vector<8x128xf32>, vector<128x128xf32>, vector<8x128xf32> -> vector<8x128xf32>
    %c0_15 = arith.constant 0 : index
    %c0_16 = arith.constant 0 : index
    %17 = vector.load %arg7[%c0_15, %c0_16] : memref<1x128xf32, #tpu.memory_space<vmem>>, vector<1x128xf32>
    %18 = vector.broadcast %17 : vector<1x128xf32> to vector<8x128xf32>
    %19 = arith.addf %16, %18 : vector<8x128xf32>
    %c0_17 = arith.constant 0 : index
    %c0_18 = arith.constant 0 : index
    %20 = vector.load %arg8[%c0_17, %c0_18] : memref<8x128xf32, #tpu.memory_space<vmem>>, vector<8x128xf32>
    tpu.vector_store %arg8[%c0_17, %c0_18], %19 {strides = array<i32>} : memref<8x128xf32, #tpu.memory_space<vmem>>, vector<8x128xf32>,
    return
  }
  func.func @transform_0(%arg0: i32) -> (i32, i32) {
    %c0_i32 = arith.constant 0 : i32
    %c0_i32_0 = arith.constant 0 : i32
    return %arg0, %c0_i32 : i32, i32
  }
  func.func @transform_1(%arg0: i32) -> (i32, i32) {
    %c0_i32 = arith.constant 0 : i32
    %c0_i32_0 = arith.constant 0 : i32
    %c0_i32_1 = arith.constant 0 : i32
    return %c0_i32, %c0_i32_0 : i32, i32
  }
  func.func @transform_2(%arg0: i32) -> (i32, i32) {
    %c0_i32 = arith.constant 0 : i32
    %c0_i32_0 = arith.constant 0 : i32
    %c0_i32_1 = arith.constant 0 : i32
    return %c0_i32, %c0_i32_0 : i32, i32
  }
  func.func @transform_3(%arg0: i32) -> (i32, i32) {
    %c0_i32 = arith.constant 0 : i32
    %c0_i32_0 = arith.constant 0 : i32
    %c0_i32_1 = arith.constant 0 : i32
    return %c0_i32, %c0_i32_0 : i32, i32
  }
  func.func @transform_4(%arg0: i32) -> (i32, i32) {
    %c0_i32 = arith.constant 0 : i32
    %c0_i32_0 = arith.constant 0 : i32
    %c0_i32_1 = arith.constant 0 : i32
    return %c0_i32, %c0_i32_0 : i32, i32
  }
  func.func @transform_5(%arg0: i32) -> (i32, i32) {
    %c0_i32 = arith.constant 0 : i32
    %c0_i32_0 = arith.constant 0 : i32
    %c0_i32_1 = arith.constant 0 : i32
    return %c0_i32, %c0_i32_0 : i32, i32
  }
  func.func @transform_6(%arg0: i32) -> (i32, i32) {
    %c0_i32 = arith.constant 0 : i32
    %c0_i32_0 = arith.constant 0 : i32
    %c0_i32_1 = arith.constant 0 : i32
    return %c0_i32, %c0_i32_0 : i32, i32
  }
  func.func @transform_7(%arg0: i32) -> (i32, i32) {
    %c0_i32 = arith.constant 0 : i32
    %c0_i32_0 = arith.constant 0 : i32
    return %arg0, %c0_i32 : i32, i32
  }
}

</mosaic_0001>

<llo_original>
// kernel: tpu_custom_call.1
$region0: #{tpu_custom_call.1}
  #allocation0 [shape = 'u32[]', space=smem, size = 0x4, offset = 0x4, fixed_abs, tag = 'smem constant byte address 0x4 - core index']
  #allocation1 [shape = 'u32[72,128]{1,0:T(1,128)}', space=vmem, size = 0x9000, scoped, tag = 'internal scratch']
  %s0 = inlined_call_operand.hbm [shape: f32[8,128], index: 0, kind: input, shape index: {}]
  %s1 = inlined_call_operand.hbm [shape: f32[128,128], index: 1, kind: input, shape index: {}]
  %s2 = inlined_call_operand.vmem [shape: f32[1,128], index: 2, kind: input, shape index: {}]
  %s3 = inlined_call_operand.hbm [shape: f32[128,128], index: 3, kind: input, shape index: {}]
  %s4 = inlined_call_operand.vmem [shape: f32[1,128], index: 4, kind: input, shape index: {}]
  %s5 = inlined_call_operand.hbm [shape: f32[128,128], index: 5, kind: input, shape index: {}]
  %s6 = inlined_call_operand.vmem [shape: f32[1,128], index: 6, kind: input, shape index: {}]
  %s7 = inlined_call_operand.hbm [shape: f32[8,128], index: 7, kind: output, shape index: {}]
  %s8 = sld [smem:[#allocation0]]
  $region54: #{tpu_custom_call.1} parent=0
    _
  %s10 = ssub.s32 1, %s8
  %s11 = scalar_select 0, %s10, %s8
  $region1: #{tpu_custom_call.1} parent=0
    #allocation2 [shape = 'u8[4096]{0}', space=vmem, size = 0x1000, scoped, tag = 'input window, operand 0, single buffered']
    #allocation3 [shape = 's32[1]{0}', space=sflag, size = 0x4, scoped, tag = 'scoped memory for tpu_custom_call.1']
    #allocation4 [shape = 's32[1]{0}', space=sflag, size = 0x4, scoped, tag = 'scoped memory for tpu_custom_call.1']
    #allocation5 [shape = 'u8[65536]{0}', space=vmem, size = 0x10000, scoped, tag = 'input window, operand 1, single buffered']
    #allocation6 [shape = 's32[1]{0}', space=sflag, size = 0x4, scoped, tag = 'scoped memory for tpu_custom_call.1']
    #allocation7 [shape = 'u8[65536]{0}', space=vmem, size = 0x10000, scoped, tag = 'input window, operand 3, single buffered']
    #allocation8 [shape = 'u8[65536]{0}', space=vmem, size = 0x10000, scoped, tag = 'input window, operand 5, single buffered']
    #allocation9 [shape = 's32[1]{0}', space=sflag, size = 0x4, scoped, tag = 'scoped memory for tpu_custom_call.1']
    #allocation10 [shape = 'u8[4096]{0}', space=vmem, size = 0x1000, scoped, tag = 'output window, operand 0, single buffered']
    %12 = vsyncpa [#allocation3], 0
    %13 = vsyncpa [#allocation6], 0
    %14 = vsyncpa [#allocation9], 0
    %15 = vsyncpa [#allocation4], 0
    // Predicated region
    $region2: #{tpu_custom_call.1} parent=1 // pred_check
      _
    $region3: #{tpu_custom_call.1} parent=1 // pred_check_branch
      %17 = sbr.rel (0) target = $region5
    $region4: #{tpu_custom_call.1} parent=1 // pred_region
      %19 = vsyncadd [#allocation3], 0
      %s21 = sshll.u32 %s0, 4
      %s22 = int_to_ptr.hbm [resolvable:$true] %s21
      %s23 = sshll.u32 [#allocation2], 4
      %s24 = int_to_ptr.vmem [resolvable:$true] %s23
      %26 = dma.hbm_to_vmem [thread:$0]  %s22, 128, %s24, [#allocation3]
    $region5: #{tpu_custom_call.1} parent=1 // pred_fallthru
      _
    // Predicated region
    $region6: #{tpu_custom_call.1} parent=1 // pred_check
      _
    $region7: #{tpu_custom_call.1} parent=1 // pred_check_branch
      %28 = sbr.rel (0) target = $region9
    $region8: #{tpu_custom_call.1} parent=1 // pred_region
      %30 = vsyncadd [#allocation6], 0
      %s31 = sshll.u32 %s1, 4
      %s32 = int_to_ptr.hbm [resolvable:$true] %s31
      %s33 = sshll.u32 [#allocation5], 4
      %s34 = int_to_ptr.vmem [resolvable:$true] %s33
      %39 = dma.hbm_to_vmem [thread:$0]  %s32, 2048, %s34, [#allocation6], 128, 128, 8
    $region9: #{tpu_custom_call.1} parent=1 // pred_fallthru
      _
    // Predicated region
    $region10: #{tpu_custom_call.1} parent=1 // pred_check
      _
    $region11: #{tpu_custom_call.1} parent=1 // pred_check_branch
      %41 = sbr.rel (0) target = $region13
    $region12: #{tpu_custom_call.1} parent=1 // pred_region
      _
    $region13: #{tpu_custom_call.1} parent=1 // pred_fallthru
      _
    // Predicated region
    $region14: #{tpu_custom_call.1} parent=1 // pred_check
      _
    $region15: #{tpu_custom_call.1} parent=1 // pred_check_branch
      %43 = sbr.rel (0) target = $region17
    $region16: #{tpu_custom_call.1} parent=1 // pred_region
      %45 = vsyncadd [#allocation6], 0
      %s46 = sshll.u32 %s3, 4
      %s47 = int_to_ptr.hbm [resolvable:$true] %s46
      %s48 = sshll.u32 [#allocation7], 4
      %s49 = int_to_ptr.vmem [resolvable:$true] %s48
      %54 = dma.hbm_to_vmem [thread:$0]  %s47, 2048, %s49, [#allocation6], 128, 128, 8
    $region17: #{tpu_custom_call.1} parent=1 // pred_fallthru
      _
    // Predicated region
    $region18: #{tpu_custom_call.1} parent=1 // pred_check
      _
    $region19: #{tpu_custom_call.1} parent=1 // pred_check_branch
      %56 = sbr.rel (0) target = $region21
    $region20: #{tpu_custom_call.1} parent=1 // pred_region
      _
    $region21: #{tpu_custom_call.1} parent=1 // pred_fallthru
      _
    // Predicated region
    $region22: #{tpu_custom_call.1} parent=1 // pred_check
      _
    $region23: #{tpu_custom_call.1} parent=1 // pred_check_branch
      %58 = sbr.rel (0) target = $region25
    $region24: #{tpu_custom_call.1} parent=1 // pred_region
      %60 = vsyncadd [#allocation9], 0
      %s61 = sshll.u32 %s5, 4
      %s62 = int_to_ptr.hbm [resolvable:$true] %s61
      %s63 = sshll.u32 [#allocation8], 4
      %s64 = int_to_ptr.vmem [resolvable:$true] %s63
      %69 = dma.hbm_to_vmem [thread:$0]  %s62, 2048, %s64, [#allocation9], 128, 128, 8
    $region25: #{tpu_custom_call.1} parent=1 // pred_fallthru
      _
    // Predicated region
    $region26: #{tpu_custom_call.1} parent=1 // pred_check
      _
    $region27: #{tpu_custom_call.1} parent=1 // pred_check_branch
      %71 = sbr.rel (0) target = $region29
    $region28: #{tpu_custom_call.1} parent=1 // pred_region
      _
    $region29: #{tpu_custom_call.1} parent=1 // pred_fallthru
      _
    // Predicated region
    $region30: #{tpu_custom_call.1} parent=1 // pred_check
      _
    $region31: #{tpu_custom_call.1} parent=1 // pred_check_branch
      %73 = sbr.rel (0) target = $region33
    $region32: #{tpu_custom_call.1} parent=1 // pred_region
      %75 = dma.done [#allocation3], 128
    $region33: #{tpu_custom_call.1} parent=1 // pred_fallthru
      _
    // Predicated region
    $region34: #{tpu_custom_call.1} parent=1 // pred_check
      _
    $region35: #{tpu_custom_call.1} parent=1 // pred_check_branch
      %77 = sbr.rel (0) target = $region37
    $region36: #{tpu_custom_call.1} parent=1 // pred_region
      %79 = dma.done [#allocation6], 2048
    $region37: #{tpu_custom_call.1} parent=1 // pred_fallthru
      _
    // Predicated region
    $region38: #{tpu_custom_call.1} parent=1 // pred_check
      _
    $region39: #{tpu_custom_call.1} parent=1 // pred_check_branch
      %81 = sbr.rel (0) target = $region41
    $region40: #{tpu_custom_call.1} parent=1 // pred_region
      %83 = dma.done [#allocation6], 2048
    $region41: #{tpu_custom_call.1} parent=1 // pred_fallthru
      _
    // Predicated region
    $region42: #{tpu_custom_call.1} parent=1 // pred_check
      _
    $region43: #{tpu_custom_call.1} parent=1 // pred_check_branch
      %85 = sbr.rel (0) target = $region45
    $region44: #{tpu_custom_call.1} parent=1 // pred_region
      %87 = dma.done [#allocation9], 2048
    $region45: #{tpu_custom_call.1} parent=1 // pred_fallthru
      _
    %v88 = vld [vmem:[#allocation2] sm:$0xff]
    %v89 = vld [vmem:[#allocation5] sm:$0xff]
    %v90 = vld [vmem:[#allocation5 + $0x8] sm:$0xff]
    %v91 = vld [vmem:[#allocation5 + $0x10] sm:$0xff]
    %v92 = vld [vmem:[#allocation5 + $0x18] sm:$0xff]
    %v93 = vld [vmem:[#allocation5 + $0x20] sm:$0xff]
    %v94 = vld [vmem:[#allocation5 + $0x28] sm:$0xff]
    %v95 = vld [vmem:[#allocation5 + $0x30] sm:$0xff]
    %v96 = vld [vmem:[#allocation5 + $0x38] sm:$0xff]
    %v97 = vld [vmem:[#allocation5 + $0x40] sm:$0xff]
    %v98 = vld [vmem:[#allocation5 + $0x48] sm:$0xff]
    %v99 = vld [vmem:[#allocation5 + $0x50] sm:$0xff]
    %v100 = vld [vmem:[#allocation5 + $0x58] sm:$0xff]
    %v101 = vld [vmem:[#allocation5 + $0x60] sm:$0xff]
    %v102 = vld [vmem:[#allocation5 + $0x68] sm:$0xff]
    %v103 = vld [vmem:[#allocation5 + $0x70] sm:$0xff]
    %v104 = vld [vmem:[#allocation5 + $0x78] sm:$0xff]
    %v105 = vld [vmem:[%s2] sm:$0x1]
    %v107 = vperm.slane %v105, 0
    %109 = vmatpush.msra.mxu0 %v104
    %110 = vmatpush.msra.mxu0 %v103
    %111 = vmatpush.msra.mxu0 %v102
    %112 = vmatpush.msra.mxu0 %v101
    %113 = vmatpush.msra.mxu0 %v100
    %114 = vmatpush.msra.mxu0 %v99
    %115 = vmatpush.msra.mxu0 %v98
    %116 = vmatpush.msra.mxu0 %v97
    %117 = vmatpush.msra.mxu0 %v96
    %118 = vmatpush.msra.mxu0 %v95
    %119 = vmatpush.msra.mxu0 %v94
    %120 = vmatpush.msra.mxu0 %v93
    %121 = vmatpush.msra.mxu0 %v92
    %122 = vmatpush.msra.mxu0 %v91
    %123 = vmatpush.msra.mxu0 %v90
    %124 = vmatpush.msra.mxu0 %v89
    %125 = vmatmul.f32.gmra.mxu0 %v88
    %v126 = vpop.f32.mrf.mxu0
    %v127 = vadd.f32 %v107, %v126
    %128 = vdwg.mxu0
    %v129 = vmax.f32 %v127, 0.0
    %v130 = vld [vmem:[#allocation7] sm:$0xff]
    %v131 = vld [vmem:[#allocation7 + $0x8] sm:$0xff]
    %v132 = vld [vmem:[#allocation7 + $0x10] sm:$0xff]
    %v133 = vld [vmem:[#allocation7 + $0x18] sm:$0xff]
    %v134 = vld [vmem:[#allocation7 + $0x20] sm:$0xff]
    %v135 = vld [vmem:[#allocation7 + $0x28] sm:$0xff]
    %v136 = vld [vmem:[#allocation7 + $0x30] sm:$0xff]
    %v137 = vld [vmem:[#allocation7 + $0x38] sm:$0xff]
    %v138 = vld [vmem:[#allocation7 + $0x40] sm:$0xff]
    %v139 = vld [vmem:[#allocation7 + $0x48] sm:$0xff]
    %v140 = vld [vmem:[#allocation7 + $0x50] sm:$0xff]
    %v141 = vld [vmem:[#allocation7 + $0x58] sm:$0xff]
    %v142 = vld [vmem:[#allocation7 + $0x60] sm:$0xff]
    %v143 = vld [vmem:[#allocation7 + $0x68] sm:$0xff]
    %v144 = vld [vmem:[#allocation7 + $0x70] sm:$0xff]
    %v145 = vld [vmem:[#allocation7 + $0x78] sm:$0xff]
    %v146 = vld [vmem:[%s4] sm:$0x1]
    %v148 = vperm.slane %v146, 0
    %150 = vmatpush.msra.mxu0 %v145
    %151 = vmatpush.msra.mxu0 %v144
    %152 = vmatpush.msra.mxu0 %v143
    %153 = vmatpush.msra.mxu0 %v142
    %154 = vmatpush.msra.mxu0 %v141
    %155 = vmatpush.msra.mxu0 %v140
    %156 = vmatpush.msra.mxu0 %v139
    %157 = vmatpush.msra.mxu0 %v138
    %158 = vmatpush.msra.mxu0 %v137
    %159 = vmatpush.msra.mxu0 %v136
    %160 = vmatpush.msra.mxu0 %v135
    %161 = vmatpush.msra.mxu0 %v134
    %162 = vmatpush.msra.mxu0 %v133
    %163 = vmatpush.msra.mxu0 %v132
    %164 = vmatpush.msra.mxu0 %v131
    %165 = vmatpush.msra.mxu0 %v130
    %166 = vmatmul.f32.gmra.mxu0 %v129
    %v167 = vpop.f32.mrf.mxu0
    %v168 = vadd.f32 %v148, %v167
    %169 = vdwg.mxu0
    %v170 = vmax.f32 %v168, 0.0
    %v171 = vld [vmem:[#allocation8] sm:$0xff]
    %v172 = vld [vmem:[#allocation8 + $0x8] sm:$0xff]
    %v173 = vld [vmem:[#allocation8 + $0x10] sm:$0xff]
    %v174 = vld [vmem:[#allocation8 + $0x18] sm:$0xff]
    %v175 = vld [vmem:[#allocation8 + $0x20] sm:$0xff]
    %v176 = vld [vmem:[#allocation8 + $0x28] sm:$0xff]
    %v177 = vld [vmem:[#allocation8 + $0x30] sm:$0xff]
    %v178 = vld [vmem:[#allocation8 + $0x38] sm:$0xff]
    %v179 = vld [vmem:[#allocation8 + $0x40] sm:$0xff]
    %v180 = vld [vmem:[#allocation8 + $0x48] sm:$0xff]
    %v181 = vld [vmem:[#allocation8 + $0x50] sm:$0xff]
    %v182 = vld [vmem:[#allocation8 + $0x58] sm:$0xff]
    %v183 = vld [vmem:[#allocation8 + $0x60] sm:$0xff]
    %v184 = vld [vmem:[#allocation8 + $0x68] sm:$0xff]
    %v185 = vld [vmem:[#allocation8 + $0x70] sm:$0xff]
    %v186 = vld [vmem:[#allocation8 + $0x78] sm:$0xff]
    %v187 = vld [vmem:[%s6] sm:$0x1]
    %v189 = vperm.slane %v187, 0
    %191 = vmatpush.msra.mxu0 %v186
    %192 = vmatpush.msra.mxu0 %v185
    %193 = vmatpush.msra.mxu0 %v184
    %194 = vmatpush.msra.mxu0 %v183
    %195 = vmatpush.msra.mxu0 %v182
    %196 = vmatpush.msra.mxu0 %v181
    %197 = vmatpush.msra.mxu0 %v180
    %198 = vmatpush.msra.mxu0 %v179
    %199 = vmatpush.msra.mxu0 %v178
    %200 = vmatpush.msra.mxu0 %v177
    %201 = vmatpush.msra.mxu0 %v176
    %202 = vmatpush.msra.mxu0 %v175
    %203 = vmatpush.msra.mxu0 %v174
    %204 = vmatpush.msra.mxu0 %v173
    %205 = vmatpush.msra.mxu0 %v172
    %206 = vmatpush.msra.mxu0 %v171
    %207 = vmatmul.f32.gmra.mxu0 %v170
    %v208 = vpop.f32.mrf.mxu0
    %v209 = vadd.f32 %v189, %v208
    %210 = vdwg.mxu0
    %211 = vst [vmem:[#allocation10] sm:$0xff] %v209
    // Predicated region
    $region46: #{tpu_custom_call.1} parent=1 // pred_check
      _
    $region47: #{tpu_custom_call.1} parent=1 // pred_check_branch
      %213 = sbr.rel (0) target = $region49
    $region48: #{tpu_custom_call.1} parent=1 // pred_region
      %215 = vsyncadd [#allocation4], 0
      %s217 = sshll.u32 [#allocation10], 4
      %s218 = int_to_ptr.vmem [resolvable:$true] %s217
      %s219 = sshll.u32 %s7, 4
      %s220 = int_to_ptr.hbm [resolvable:$true] %s219
      %222 = dma.vmem_to_hbm [thread:$0]  %s218, 128, %s220, [#allocation4]
    $region49: #{tpu_custom_call.1} parent=1 // pred_fallthru
      _
    // Predicated region
    $region50: #{tpu_custom_call.1} parent=1 // pred_check
      _
    $region51: #{tpu_custom_call.1} parent=1 // pred_check_branch
      %224 = sbr.rel (0) target = $region53
    $region52: #{tpu_custom_call.1} parent=1 // pred_region
      %226 = dma.done [#allocation4], 128
    $region53: #{tpu_custom_call.1} parent=1 // pred_fallthru
      _
    %227 = vsyncpa [#allocation3], 1
    %228 = vsyncpa [#allocation6], 1
    %229 = vsyncpa [#allocation9], 1
    %230 = vsyncpa [#allocation4], 1

</llo_original>
